<compile_context>
chip_gen: v7x
topology: tpu7x:2x2x1
jax: 0.10.0
libtpu: 0.0.40
codegen_flags: <defaults>
</compile_context>

<pallas_src>
import jax
import jax.numpy as jnp
from jax import lax
from jax.experimental import pallas as pl
from jax.experimental.pallas import tpu as pltpu

LANES = 128          # lane width (last dim)
TILE_ROWS = 1024     # sublane rows per grid step; (1024,128) f32 = 512 KiB
ALIGN_ROWS = 16      # keep row count 16-aligned so bf16 inputs also tile cleanly


def _make_silog_kernel(n_valid: int, tile_rows: int, eps: float):
    """Build the kernel with static element count / tile size / eps baked in."""

    def kernel(pred_ref, gt_ref, out_ref):
        i = pl.program_id(0)

        @pl.when(i == 0)
        def _():
            out_ref[...] = jnp.zeros_like(out_ref)

        # Global element ids of this tile -> mask of real (non-padded,
        # in-bounds) elements.  Handles the ragged last block without any
        # wrapper-side full-array pad.
        row = lax.broadcasted_iota(jnp.int32, (tile_rows, LANES), 0)
        lane = lax.broadcasted_iota(jnp.int32, (tile_rows, LANES), 1)
        elem = (i * tile_rows + row) * LANES + lane
        valid = elem < n_valid

        # Sanitize invalid elements to 1.0, which is neutral for every term:
        # relu(eps - 1) = 0, log(1) = 0, 1 - 1 = 0.  Also shields the log
        # against garbage in the partial last block.
        p_raw = jnp.where(valid, pred_ref[...].astype(jnp.float32), 1.0)
        g_raw = jnp.where(valid, gt_ref[...].astype(jnp.float32), 1.0)

        relu_term = jnp.maximum(eps - p_raw, 0.0)   # zero-punish term
        p = jnp.maximum(p_raw, eps)                 # clamp(pred, min=eps)
        g = jnp.maximum(g_raw, eps)                 # clamp(gt,   min=eps)
        d = jnp.log(g) - jnp.log(p)                 # diff_log

        # Per-step partial reduction along sublanes only (cheap VPU adds);
        # accumulator stays lane-shaped.  Cross-lane reduction happens once
        # in the wrapper.
        out_ref[0:1, :] += jnp.sum(relu_term, axis=0, keepdims=True)
        out_ref[1:2, :] += jnp.sum(d, axis=0, keepdims=True)
        out_ref[2:3, :] += jnp.sum(d * d, axis=0, keepdims=True)
        out_ref[3:4, :] += jnp.sum(p - g, axis=0, keepdims=True)

    return kernel


def silog_loss(pred_depth, gt_depth, *, eps=1e-6, lambd=0.5,
               zero_punish=1e6, penalty_weight=1.0):
    """JAX/Pallas equivalent of SiLogLoss.forward (valid_mask=None path)."""
    # TODO(synk): valid_mask (boolean indexing pred[valid_mask]) not implemented.
    assert pred_depth.shape == gt_depth.shape
    n = int(pred_depth.size)

    pred_flat = jnp.ravel(pred_depth)
    gt_flat = jnp.ravel(gt_depth)

    # Lane-dense (rows, 128) slab.  Only the tail is aligned (<= ALIGN_ROWS*
    # LANES - 1 extra elements); pad value is irrelevant because the kernel
    # masks against the true count (1.0 is neutral anyway).
    pad = (-n) % (ALIGN_ROWS * LANES)
    if pad:
        pred_flat = jnp.pad(pred_flat, (0, pad), constant_values=1.0)
        gt_flat = jnp.pad(gt_flat, (0, pad), constant_values=1.0)
    rows = (n + pad) // LANES
    pred2d = pred_flat.reshape(rows, LANES)
    gt2d = gt_flat.reshape(rows, LANES)

    tile_rows = min(TILE_ROWS, rows)
    grid = (pl.cdiv(rows, tile_rows),)

    sums = pl.pallas_call(
        _make_silog_kernel(n, tile_rows, float(eps)),
        out_shape=jax.ShapeDtypeStruct((4, LANES), jnp.float32),
        grid_spec=pltpu.PrefetchScalarGridSpec(
            num_scalar_prefetch=0,
            grid=grid,
            in_specs=[
                pl.BlockSpec((tile_rows, LANES), lambda i: (i, 0)),
                pl.BlockSpec((tile_rows, LANES), lambda i: (i, 0)),
            ],
            out_specs=pl.BlockSpec((4, LANES), lambda i: (0, 0)),
        ),
        compiler_params=pltpu.CompilerParams(
            dimension_semantics=("arbitrary",)),
    )(pred2d, gt2d)

    totals = jnp.sum(sums, axis=1)                 # tiny final cross-lane reduce
    relu_sum = totals[0]
    d_sum = totals[1]
    d2_sum = totals[2]
    pt_sum = totals[3]                             # sum(clamp(pred) - clamp(gt))

    nf = jnp.float32(n)
    mean_d = d_sum / nf
    mean_d2 = d2_sum / nf
    core = jnp.sqrt(mean_d2 - jnp.float32(lambd) * mean_d * mean_d)
    penalty = jnp.float32(penalty_weight) * jnp.log(jnp.abs(pt_sum / nf))
    return core + penalty + jnp.float32(zero_punish) * relu_sum


def silog_ref(pred, gt, eps=1e-6, lambd=0.5, zero_punish=1e6, penalty_weight=1.0):
    """Pure-JAX reference mirroring the PyTorch module (valid_mask=None)."""
    zp = jnp.sum(jnp.maximum(eps - pred, 0.0))
    p = jnp.maximum(pred, eps)
    t = jnp.maximum(gt, eps)
    d = jnp.log(t) - jnp.log(p)
    loss = jnp.sqrt(jnp.mean(d * d) - lambd * jnp.mean(d) ** 2)
    return (loss
            + penalty_weight * jnp.log(jnp.abs(jnp.mean(p) - jnp.mean(t)))
            + zp * zero_punish)


if __name__ == "__main__":
    key = jax.random.PRNGKey(0)
    k1, k2, k3, k4 = jax.random.split(key, 4)

    # Test 1: small depth maps (B, 1, H, W); one exact zero in pred exercises
    # the zero-punish and clamp paths.
    B, C, H, W = 2, 1, 16, 16
    pred = jax.random.uniform(k1, (B, C, H, W), jnp.float32, 0.1, 10.0)
    gt = jax.random.uniform(k2, (B, C, H, W), jnp.float32, 0.5, 12.0)
    pred = pred.at[0, 0, 0, 0].set(0.0)

    loss = silog_loss(pred, gt)
    jax.block_until_ready(loss)
    ref = silog_ref(pred, gt)
    assert jnp.isfinite(loss), loss
    assert jnp.allclose(loss, ref, rtol=1e-3, atol=1e-3), (loss, ref)

    # Test 2: multi-step grid with a ragged (partial) last block.
    B2, H2, W2 = 2, 256, 320     # 163840 elems -> 1280 rows -> grid of 2 steps
    pred2 = jax.random.uniform(k3, (B2, 1, H2, W2), jnp.float32, 0.1, 10.0)
    gt2 = jax.random.uniform(k4, (B2, 1, H2, W2), jnp.float32, 0.5, 12.0)
    loss2 = silog_loss(pred2, gt2)
    jax.block_until_ready(loss2)
    ref2 = silog_ref(pred2, gt2)
    assert jnp.allclose(loss2, ref2, rtol=1e-3, atol=1e-3), (loss2, ref2)

    print("KERNEL_OK")
</pallas_src>

<mosaic_0001>
module attributes {stable_mosaic.version = 11 : i64} {
  func.func @kernel(%arg0: i32, %arg1: memref<16x128xf32, #tpu.memory_space<vmem>>, %arg2: memref<16x128xf32, #tpu.memory_space<vmem>>, %arg3: memref<4x128xf32, #tpu.memory_space<vmem>>) attributes {dimension_semantics = [#tpu.dimension_semantics<arbitrary>], iteration_bounds = array<i64: 1>, scalar_prefetch = 0 : i64, scratch_operands = 0 : i64, tpu.core_type = #tpu.core_type<tc>, window_params = [{transform_indices = @transform_0, window_bounds = array<i64: 16, 128>}, {transform_indices = @transform_1, window_bounds = array<i64: 16, 128>}, {pipeline_mode = #tpu.pipeline_mode<synchronous>, transform_indices = @transform_2, window_bounds = array<i64: 4, 128>}]} {
    %c0_i32 = arith.constant 0 : i32
    %0 = arith.cmpi eq, %arg0, %c0_i32 : i32
    %1 = arith.extui %0 : i1 to i32
    %c0_i32_0 = arith.constant 0 : i32
    %2 = arith.cmpi ne, %1, %c0_i32_0 : i32
    scf.if %2 {
      %cst_26 = arith.constant 0.000000e+00 : f32
      %52 = vector.broadcast %cst_26 : f32 to vector<4x128xf32>
      %c0_27 = arith.constant 0 : index
      %c0_28 = arith.constant 0 : index
      %53 = vector.load %arg3[%c0_27, %c0_28] : memref<4x128xf32, #tpu.memory_space<vmem>>, vector<4x128xf32>
      tpu.vector_store %arg3[%c0_27, %c0_28], %52 {strides = array<i32>} : memref<4x128xf32, #tpu.memory_space<vmem>>, vector<4x128xf32>,
    } else {
    }
    %3 = tpu.iota {dimensions = array<i32: 0>} : vector<16x128xi32>
    %4 = tpu.iota {dimensions = array<i32: 1>} : vector<16x128xi32>
    %c16_i32 = arith.constant 16 : i32
    %5 = arith.muli %arg0, %c16_i32 : i32
    %6 = vector.broadcast %5 : i32 to vector<16x128xi32>
    %7 = arith.addi %6, %3 : vector<16x128xi32>
    %c128_i32 = arith.constant 128 : i32
    %8 = vector.broadcast %c128_i32 : i32 to vector<16x128xi32>
    %9 = arith.muli %7, %8 : vector<16x128xi32>
    %10 = arith.addi %9, %4 : vector<16x128xi32>
    %c512_i32 = arith.constant 512 : i32
    %11 = vector.broadcast %c512_i32 : i32 to vector<16x128xi32>
    %12 = arith.cmpi slt, %10, %11 : vector<16x128xi32>
    %c0 = arith.constant 0 : index
    %c0_1 = arith.constant 0 : index
    %13 = vector.load %arg1[%c0, %c0_1] : memref<16x128xf32, #tpu.memory_space<vmem>>, vector<16x128xf32>
    %cst = arith.constant 1.000000e+00 : f32
    %14 = vector.broadcast %cst : f32 to vector<16x128xf32>
    %15 = arith.select %12, %13, %14 : vector<16x128xi1>, vector<16x128xf32>
    %c0_2 = arith.constant 0 : index
    %c0_3 = arith.constant 0 : index
    %16 = vector.load %arg2[%c0_2, %c0_3] : memref<16x128xf32, #tpu.memory_space<vmem>>, vector<16x128xf32>
    %cst_4 = arith.constant 1.000000e+00 : f32
    %17 = vector.broadcast %cst_4 : f32 to vector<16x128xf32>
    %18 = arith.select %12, %16, %17 : vector<16x128xi1>, vector<16x128xf32>
    %cst_5 = arith.constant 9.99999997E-7 : f32
    %19 = vector.broadcast %cst_5 : f32 to vector<16x128xf32>
    %20 = arith.subf %19, %15 : vector<16x128xf32>
    %cst_6 = arith.constant 0.000000e+00 : f32
    %21 = vector.broadcast %cst_6 : f32 to vector<16x128xf32>
    %22 = arith.maximumf %20, %21 : vector<16x128xf32>
    %cst_7 = arith.constant 9.99999997E-7 : f32
    %23 = vector.broadcast %cst_7 : f32 to vector<16x128xf32>
    %24 = arith.maximumf %15, %23 : vector<16x128xf32>
    %cst_8 = arith.constant 9.99999997E-7 : f32
    %25 = vector.broadcast %cst_8 : f32 to vector<16x128xf32>
    %26 = arith.maximumf %18, %25 : vector<16x128xf32>
    %27 = math.log %26 : vector<16x128xf32>
    %28 = math.log %24 : vector<16x128xf32>
    %29 = arith.subf %27, %28 : vector<16x128xf32>
    %c0_9 = arith.constant 0 : index
    %c0_10 = arith.constant 0 : index
    %30 = vector.load %arg3[%c0_9, %c0_10] : memref<4x128xf32, #tpu.memory_space<vmem>>, vector<1x128xf32>
    %cst_11 = arith.constant dense<0.000000e+00> : vector<128xf32>
    %31 = vector.multi_reduction <add>, %22, %cst_11 [0] : vector<16x128xf32> to vector<128xf32>
    %32 = vector.shape_cast %31 : vector<128xf32> to vector<1x128xf32>
    %33 = arith.addf %30, %32 : vector<1x128xf32>
    %c0_12 = arith.constant 0 : index
    %c0_13 = arith.constant 0 : index
    %34 = vector.load %arg3[%c0_12, %c0_13] : memref<4x128xf32, #tpu.memory_space<vmem>>, vector<1x128xf32>
    tpu.vector_store %arg3[%c0_12, %c0_13], %33 {strides = array<i32>} : memref<4x128xf32, #tpu.memory_space<vmem>>, vector<1x128xf32>,
    %c1 = arith.constant 1 : index
    %c0_14 = arith.constant 0 : index
    %35 = vector.load %arg3[%c1, %c0_14] : memref<4x128xf32, #tpu.memory_space<vmem>>, vector<1x128xf32>
    %cst_15 = arith.constant dense<0.000000e+00> : vector<128xf32>
    %36 = vector.multi_reduction <add>, %29, %cst_15 [0] : vector<16x128xf32> to vector<128xf32>
    %37 = vector.shape_cast %36 : vector<128xf32> to vector<1x128xf32>
    %38 = arith.addf %35, %37 : vector<1x128xf32>
    %c1_16 = arith.constant 1 : index
    %c0_17 = arith.constant 0 : index
    %39 = vector.load %arg3[%c1_16, %c0_17] : memref<4x128xf32, #tpu.memory_space<vmem>>, vector<1x128xf32>
    tpu.vector_store %arg3[%c1_16, %c0_17], %38 {strides = array<i32>} : memref<4x128xf32, #tpu.memory_space<vmem>>, vector<1x128xf32>,
    %c2 = arith.constant 2 : index
    %c0_18 = arith.constant 0 : index
    %40 = vector.load %arg3[%c2, %c0_18] : memref<4x128xf32, #tpu.memory_space<vmem>>, vector<1x128xf32>
    %41 = arith.mulf %29, %29 : vector<16x128xf32>
    %cst_19 = arith.constant dense<0.000000e+00> : vector<128xf32>
    %42 = vector.multi_reduction <add>, %41, %cst_19 [0] : vector<16x128xf32> to vector<128xf32>
    %43 = vector.shape_cast %42 : vector<128xf32> to vector<1x128xf32>
    %44 = arith.addf %40, %43 : vector<1x128xf32>
    %c2_20 = arith.constant 2 : index
    %c0_21 = arith.constant 0 : index
    %45 = vector.load %arg3[%c2_20, %c0_21] : memref<4x128xf32, #tpu.memory_space<vmem>>, vector<1x128xf32>
    tpu.vector_store %arg3[%c2_20, %c0_21], %44 {strides = array<i32>} : memref<4x128xf32, #tpu.memory_space<vmem>>, vector<1x128xf32>,
    %c3 = arith.constant 3 : index
    %c0_22 = arith.constant 0 : index
    %46 = vector.load %arg3[%c3, %c0_22] : memref<4x128xf32, #tpu.memory_space<vmem>>, vector<1x128xf32>
    %47 = arith.subf %24, %26 : vector<16x128xf32>
    %cst_23 = arith.constant dense<0.000000e+00> : vector<128xf32>
    %48 = vector.multi_reduction <add>, %47, %cst_23 [0] : vector<16x128xf32> to vector<128xf32>
    %49 = vector.shape_cast %48 : vector<128xf32> to vector<1x128xf32>
    %50 = arith.addf %46, %49 : vector<1x128xf32>
    %c3_24 = arith.constant 3 : index
    %c0_25 = arith.constant 0 : index
    %51 = vector.load %arg3[%c3_24, %c0_25] : memref<4x128xf32, #tpu.memory_space<vmem>>, vector<1x128xf32>
    tpu.vector_store %arg3[%c3_24, %c0_25], %50 {strides = array<i32>} : memref<4x128xf32, #tpu.memory_space<vmem>>, vector<1x128xf32>,
    return
  }
  func.func @transform_0(%arg0: i32) -> (i32, i32) {
    %c0_i32 = arith.constant 0 : i32
    %c0_i32_0 = arith.constant 0 : i32
    return %arg0, %c0_i32 : i32, i32
  }
  func.func @transform_1(%arg0: i32) -> (i32, i32) {
    %c0_i32 = arith.constant 0 : i32
    %c0_i32_0 = arith.constant 0 : i32
    return %arg0, %c0_i32 : i32, i32
  }
  func.func @transform_2(%arg0: i32) -> (i32, i32) {
    %c0_i32 = arith.constant 0 : i32
    %c0_i32_0 = arith.constant 0 : i32
    %c0_i32_1 = arith.constant 0 : i32
    return %c0_i32, %c0_i32_0 : i32, i32
  }
}

</mosaic_0001>

<llo_original>
// kernel: tpu_custom_call.1
$region0: #{tpu_custom_call.1}
  #allocation0 [shape = 'u32[]', space=smem, size = 0x4, offset = 0x4, fixed_abs, tag = 'smem constant byte address 0x4 - core index']
  #allocation1 [shape = 'u32[144,128]{1,0:T(1,128)}', space=vmem, size = 0x12000, scoped, tag = 'internal scratch']
  %s0 = inlined_call_operand.hbm [shape: f32[16,128], index: 0, kind: input, shape index: {}]
  %s1 = inlined_call_operand.hbm [shape: f32[16,128], index: 1, kind: input, shape index: {}]
  %s2 = inlined_call_operand.hbm [shape: f32[4,128], index: 2, kind: output, shape index: {}]
  %s3 = sld [smem:[#allocation0]]
  $region30: #{tpu_custom_call.1} parent=0
    _
  %s5 = ssub.s32 1, %s3
  %s6 = scalar_select 0, %s5, %s3
  $region1: #{tpu_custom_call.1} parent=0
    #allocation2 [shape = 'u8[8192]{0}', space=vmem, size = 0x2000, scoped, tag = 'input window, operand 0, single buffered']
    #allocation3 [shape = 's32[1]{0}', space=sflag, size = 0x4, scoped, tag = 'scoped memory for tpu_custom_call.1']
    #allocation4 [shape = 's32[1]{0}', space=sflag, size = 0x4, scoped, tag = 'scoped memory for tpu_custom_call.1']
    #allocation5 [shape = 'u8[8192]{0}', space=vmem, size = 0x2000, scoped, tag = 'input window, operand 1, single buffered']
    #allocation6 [shape = 's32[1]{0}', space=sflag, size = 0x4, scoped, tag = 'scoped memory for tpu_custom_call.1']
    #allocation7 [shape = 'u8[2048]{0}', space=vmem, size = 0x800, scoped, tag = 'output window, operand 0, single buffered']
    %7 = vsyncpa [#allocation3], 0
    %8 = vsyncpa [#allocation6], 0
    %9 = vsyncpa [#allocation4], 0
    // Predicated region
    $region2: #{tpu_custom_call.1} parent=1 // pred_check
      _
    $region3: #{tpu_custom_call.1} parent=1 // pred_check_branch
      %11 = sbr.rel (0) target = $region5
    $region4: #{tpu_custom_call.1} parent=1 // pred_region
      %s13 = ssub.s32 256, 256
      %14 = vsyncadd [#allocation3], %s13
      %s15 = sshll.u32 [#allocation2], 4
      %s16 = int_to_ptr.vmem [resolvable:$true] %s15
      %21 = dma.hbm_to_vmem [thread:$0]  %s0, 256, %s16, [#allocation3], 128, 128, 8
    $region5: #{tpu_custom_call.1} parent=1 // pred_fallthru
      _
    // Predicated region
    $region6: #{tpu_custom_call.1} parent=1 // pred_check
      _
    $region7: #{tpu_custom_call.1} parent=1 // pred_check_branch
      %23 = sbr.rel (0) target = $region9
    $region8: #{tpu_custom_call.1} parent=1 // pred_region
      %s25 = ssub.s32 256, 256
      %26 = vsyncadd [#allocation6], %s25
      %s27 = sshll.u32 [#allocation5], 4
      %s28 = int_to_ptr.vmem [resolvable:$true] %s27
      %33 = dma.hbm_to_vmem [thread:$0]  %s1, 256, %s28, [#allocation6], 128, 128, 8
    $region9: #{tpu_custom_call.1} parent=1 // pred_fallthru
      _
    // Predicated region
    $region10: #{tpu_custom_call.1} parent=1 // pred_check
      _
    $region11: #{tpu_custom_call.1} parent=1 // pred_check_branch
      %35 = sbr.rel (0) target = $region13
    $region12: #{tpu_custom_call.1} parent=1 // pred_region
      %36 = dma.done [#allocation3], 256
    $region13: #{tpu_custom_call.1} parent=1 // pred_fallthru
      _
    // Predicated region
    $region14: #{tpu_custom_call.1} parent=1 // pred_check
      _
    $region15: #{tpu_custom_call.1} parent=1 // pred_check_branch
      %38 = sbr.rel (0) target = $region17
    $region16: #{tpu_custom_call.1} parent=1 // pred_region
      %39 = dma.done [#allocation6], 256
    $region17: #{tpu_custom_call.1} parent=1 // pred_fallthru
      _
    %p40 = scmp.eq.s32.totalorder 0, 0
    // Predicated region
    $region18: #{tpu_custom_call.1} parent=1 // pred_check
      %p41 = pneg %p40
    $region19: #{tpu_custom_call.1} parent=1 // pred_check_branch
      %43 = sbr.rel (%p41) target = $region21
    $region20: #{tpu_custom_call.1} parent=1 // pred_region
      %44 = vst [vmem:[#allocation7] sm:$0xf] 0.0
    $region21: #{tpu_custom_call.1} parent=1 // pred_fallthru
      _
    %v45 = vlaneseq
    %v46 = vshrl.u32 %v45, 7
    %v47 = vadd.s32 %v46, 8
    %v48 = vlaneseq
    %v49 = vand.u32 %v48, 127
    %s50 = smul.u32 0, 16
    %v51 = vstv %s50
    %v52 = vadd.s32 %v51, %v46
    %v53 = vadd.s32 %v51, %v47
    %v54 = vmul.u32 %v52, 128
    %v55 = vmul.u32 %v53, 128
    %v56 = vadd.s32 %v54, %v49
    %v57 = vadd.s32 %v55, %v49
    %vm58 = vcmp.lt.s32.totalorder %v56, 512
    %vm59 = vcmp.lt.s32.totalorder %v57, 512
    %v60 = vld [vmem:[#allocation2] sm:$0xff]
    %v61 = vld [vmem:[#allocation2 + $0x8] sm:$0xff]
    %v62 = vsel %vm58, %v60, 1.0
    %v63 = vsel %vm59, %v61, 1.0
    %v64 = vld [vmem:[#allocation5] sm:$0xff]
    %v65 = vld [vmem:[#allocation5 + $0x8] sm:$0xff]
    %v66 = vsel %vm58, %v64, 1.0
    %v67 = vsel %vm59, %v65, 1.0
    %v68 = vsub.f32 1e-06, %v62
    %v69 = vsub.f32 1e-06, %v63
    %v70 = vmax.f32 %v68, 0.0
    %v71 = vmax.f32 %v69, 0.0
    %v72 = vmax.f32 %v62, 1e-06
    %v73 = vmax.f32 %v63, 1e-06
    %v74 = vmax.f32 %v66, 1e-06
    %v75 = vmax.f32 %v67, 1e-06
    %v76 = vlog2.pop %v74
    %v77 = vmul.f32 %v76, 0.6931472
    %v78 = vlog2.pop %v75
    %v79 = vmul.f32 %v78, 0.6931472
    %v80 = vlog2.pop %v72
    %v81 = vmul.f32 %v80, 0.6931472
    %v82 = vlog2.pop %v73
    %v83 = vmul.f32 %v82, 0.6931472
    %v84 = vsub.f32 %v77, %v81
    %v85 = vsub.f32 %v79, %v83
    %v86 = vld [vmem:[#allocation7] sm:$0x1]
    %v87 = vadd.f32 %v70, %v71
    %v88 = vrot.slane %v87, 4
    %v89 = vadd.f32 %v87, %v88
    %v90 = vrot.slane %v89, 2
    %v91 = vadd.f32 %v89, %v90
    %v92 = vrot.slane %v91, 1
    %v93 = vadd.f32 %v91, %v92
    %v94 = vadd.f32 %v86, %v93
    %95 = vst [vmem:[#allocation7] sm:$0x1] %v94
    %v96 = vld [vmem:[#allocation7 + $0x1] sm:$0x1]
    %v97 = vadd.f32 %v84, %v85
    %v98 = vrot.slane %v97, 4
    %v99 = vadd.f32 %v97, %v98
    %v100 = vrot.slane %v99, 2
    %v101 = vadd.f32 %v99, %v100
    %v102 = vrot.slane %v101, 1
    %v103 = vadd.f32 %v101, %v102
    %v104 = vadd.f32 %v96, %v103
    %105 = vst [vmem:[#allocation7 + $0x1] sm:$0x1] %v104
    %v106 = vld [vmem:[#allocation7 + $0x2] sm:$0x1]
    %v107 = vmul.f32 %v84, %v84
    %v108 = vmul.f32 %v85, %v85
    %v109 = vadd.f32 %v107, %v108
    %v110 = vrot.slane %v109, 4
    %v111 = vadd.f32 %v109, %v110
    %v112 = vrot.slane %v111, 2
    %v113 = vadd.f32 %v111, %v112
    %v114 = vrot.slane %v113, 1
    %v115 = vadd.f32 %v113, %v114
    %v116 = vadd.f32 %v106, %v115
    %117 = vst [vmem:[#allocation7 + $0x2] sm:$0x1] %v116
    %v118 = vld [vmem:[#allocation7 + $0x3] sm:$0x1]
    %v119 = vsub.f32 %v72, %v74
    %v120 = vsub.f32 %v73, %v75
    %v121 = vadd.f32 %v119, %v120
    %v122 = vrot.slane %v121, 4
    %v123 = vadd.f32 %v121, %v122
    %v124 = vrot.slane %v123, 2
    %v125 = vadd.f32 %v123, %v124
    %v126 = vrot.slane %v125, 1
    %v127 = vadd.f32 %v125, %v126
    %v128 = vadd.f32 %v118, %v127
    %129 = vst [vmem:[#allocation7 + $0x3] sm:$0x1] %v128
    // Predicated region
    $region22: #{tpu_custom_call.1} parent=1 // pred_check
      _
    $region23: #{tpu_custom_call.1} parent=1 // pred_check_branch
      %131 = sbr.rel (0) target = $region25
    $region24: #{tpu_custom_call.1} parent=1 // pred_region
      %s133 = ssub.s32 64, 64
      %134 = vsyncadd [#allocation4], %s133
      %s136 = sshll.u32 [#allocation7], 4
      %s137 = int_to_ptr.vmem [resolvable:$true] %s136
      %139 = dma.vmem_to_hbm [thread:$0]  %s137, 64, %s2, [#allocation4]
    $region25: #{tpu_custom_call.1} parent=1 // pred_fallthru
      _
    // Predicated region
    $region26: #{tpu_custom_call.1} parent=1 // pred_check
      _
    $region27: #{tpu_custom_call.1} parent=1 // pred_check_branch
      %141 = sbr.rel (0) target = $region29
    $region28: #{tpu_custom_call.1} parent=1 // pred_region
      %142 = dma.done [#allocation4], 64
    $region29: #{tpu_custom_call.1} parent=1 // pred_fallthru
      _
    %143 = vsyncpa [#allocation3], 1
    %144 = vsyncpa [#allocation6], 1
    %145 = vsyncpa [#allocation4], 1

</llo_original>
